<compile_context>
chip_gen: v6e
topology: v6e:2x2x1
jax: 0.10.0
libtpu: 0.0.40
codegen_flags: <defaults>
</compile_context>

<pallas_src>
import jax
import jax.numpy as jnp
from jax.experimental import pallas as pl
from jax.experimental.pallas import tpu as pltpu


# ---------------------------------------------------------------------------
# Kernels: one (channels, pixel-tile) slab per grid step.
# ---------------------------------------------------------------------------
def _attention_gate_kernel_vpu_psi(g_ref, x_ref, wgt_ref, wxt_ref, p_ref,
                                   out_ref):
    # p_ref: (F_int, 3) f32 slab, columns = [b_g + b_x, w_psi, b_psi (bcast)].
    g = g_ref[...]                                     # (F_g, T)
    x = x_ref[...]                                     # (F_l, T)

    # Fused projections: h = relu(Wg^T g + Wx^T x + (bg + bx))
    acc = jnp.dot(wgt_ref[...], g, preferred_element_type=jnp.float32)
    acc = acc + jnp.dot(wxt_ref[...], x, preferred_element_type=jnp.float32)
    h = jnp.maximum(acc + p_ref[:, 0:1], 0.0)          # (F_int, T) f32

    # width-1 psi conv as VPU multiply + sublane (XLU) reduction (tiny F_int).
    p = jnp.sum(h * p_ref[:, 1:2], axis=0, keepdims=True) + p_ref[0:1, 2:3]
    psi = jax.nn.sigmoid(p)                            # (1, T) f32

    # Cast psi (1, T) down instead of upcasting x (F_l, T).
    out_ref[...] = (x * psi.astype(x.dtype)).astype(out_ref.dtype)


def _attention_gate_kernel_mxu_psi(g_ref, x_ref, wgt_ref, wxt_ref, b_ref,
                                   wp_ref, out_ref):
    # b_ref : (F_int, 2) f32 slab, columns = [b_g + b_x, b_psi (bcast)].
    # wp_ref: (8, F_int) f32, row 0 = w_psi, rows 1..7 = 0.
    g = g_ref[...]                                     # (F_g, T)
    x = x_ref[...]                                     # (F_l, T)

    acc = jnp.dot(wgt_ref[...], g, preferred_element_type=jnp.float32)
    acc = acc + jnp.dot(wxt_ref[...], x, preferred_element_type=jnp.float32)
    h = jnp.maximum(acc + b_ref[:, 0:1], 0.0)          # (F_int, T) f32

    # psi via the (otherwise idle) MXU; keep only the meaningful row.
    p = jnp.dot(wp_ref[...], h, preferred_element_type=jnp.float32)[0:1, :]
    psi = jax.nn.sigmoid(p + b_ref[0:1, 1:2])          # (1, T) f32

    out_ref[...] = (x * psi.astype(x.dtype)).astype(out_ref.dtype)


# ---------------------------------------------------------------------------
# Parameter prep / sizing (glue, not hot path).
# ---------------------------------------------------------------------------
def _fold_bn(w, b, gamma, beta, mean, var, eps=1e-5):
    """Fold inference-mode BatchNorm into a preceding 1x1 conv (w: (Cin, Cout))."""
    scale = gamma / jnp.sqrt(var + eps)                # (Cout,)
    w_eff = w * scale[None, :]
    b_eff = b * scale + (beta - mean * scale)
    return w_eff, b_eff


def _vmem_budgets():
    """Generation-aware VMEM budgets (v5e/v6e: 128 MiB, v7x: 64 MiB per TC)."""
    try:
        cap = int(pltpu.get_tpu_info().vmem_capacity_bytes)
    except Exception:
        cap = 64 * 1024 * 1024                         # conservative fallback
    tile_budget = (cap * 5) // 16                      # ~40 MiB on 128, ~20 on 64
    vmem_limit = (cap * 3) // 4                        # ~96 MiB on 128, ~48 on 64
    return tile_budget, vmem_limit


def _pick_tile_hw(HW, N, F_g, F_l, F_int, in_itemsize, out_itemsize,
                  budget_bytes, *, max_tile=8192, min_parallel_steps=4):
    """Largest lane tile (multiple of 128) whose per-step VMEM footprint fits
    the budget, then capped so the parallel grid has >= min_parallel_steps
    iterations (keeps both v7x TensorCores fed at small batch)."""
    # Double-buffered streamed g/x tiles and output tile, plus the f32
    # intermediates that live per tile: acc/h (F_int, T) and the f32 upcasts
    # of g/x feeding the f32-weight matmuls.
    per_col = (2 * ((F_g + F_l) * in_itemsize + F_l * out_itemsize)
               + (F_int + F_g + F_l) * 4)
    cap = min((budget_bytes // max(per_col, 1)) // 128 * 128, max_tile)
    cap = max(cap, 128)
    tile = HW if HW <= cap else cap                    # full-extent block is legal

    need_tiles = -(-min_parallel_steps // max(N, 1))   # ceil div
    if need_tiles > 1 and HW >= need_tiles * 128:
        tile = min(tile, max((HW // need_tiles) // 128 * 128, 128))
    return tile


def attention_gate(g, x, params, *, tile_hw=None, storage_dtype=None,
                   out_dtype=None, weight_dtype=jnp.float32, buffer_depth=None):
    """g, x: NCHW.  storage_dtype (e.g. bf16) halves input HBM reads on
    v5e/v6e/v7x alike; out_dtype defaults to the storage dtype (x.dtype when
    storage_dtype is None).  Projection weights stay f32 by default."""
    N, F_g, H, W = g.shape
    _, F_l, _, _ = x.shape
    F_int = params["wg"].shape[1]
    HW = H * W

    in_dtype = (jnp.dtype(storage_dtype) if storage_dtype is not None
                else jnp.dtype(x.dtype))
    out_dt = jnp.dtype(out_dtype) if out_dtype is not None else in_dtype
    w_dtype = jnp.dtype(weight_dtype)

    # Fold BN (inference mode) into conv weights/biases.
    wg, bg = _fold_bn(params["wg"], params["bg"], params["bn_g_gamma"],
                      params["bn_g_beta"], params["bn_g_mean"], params["bn_g_var"])
    wx, bx = _fold_bn(params["wx"], params["bx"], params["bn_x_gamma"],
                      params["bn_x_beta"], params["bn_x_mean"], params["bn_x_var"])
    wp, bp = _fold_bn(params["wp"], params["bp"], params["bn_p_gamma"],
                      params["bn_p_beta"], params["bn_p_mean"], params["bn_p_var"])

    wgT = wg.T.astype(w_dtype)                         # (F_int, F_g)
    wxT = wx.T.astype(w_dtype)                         # (F_int, F_l)
    b1 = (bg + bx).astype(jnp.float32)                 # (F_int,)
    wp_vec = wp.reshape(F_int).astype(jnp.float32)
    bp_col = jnp.broadcast_to(bp.reshape(1).astype(jnp.float32), (F_int,))

    use_mxu_psi = F_int >= 64
    if use_mxu_psi:
        pslab = jnp.stack([b1, bp_col], axis=1)        # (F_int, 2)
        wp_pad = jnp.zeros((8, F_int), jnp.float32).at[0].set(wp_vec)
        kernel = _attention_gate_kernel_mxu_psi
    else:
        pslab = jnp.stack([b1, wp_vec, bp_col], axis=1)  # (F_int, 3)
        wp_pad = None
        kernel = _attention_gate_kernel_vpu_psi

    # Free reshapes: NCHW -> (N, C, H*W). No transposes, no padding copies.
    g3 = g.reshape(N, F_g, HW).astype(in_dtype)
    x3 = x.reshape(N, F_l, HW).astype(in_dtype)

    tile_budget, vmem_limit = _vmem_budgets()
    if tile_hw is None:
        tile_hw = _pick_tile_hw(HW, N, F_g, F_l, F_int,
                                in_dtype.itemsize, out_dt.itemsize, tile_budget)

    grid = (N, pl.cdiv(HW, tile_hw))
    const = lambda n, j: (0, 0)

    stream_kwargs = {}
    if buffer_depth is not None and buffer_depth != 2:
        # v5e-only knob: deepen the g/x pipeline if profiling shows exposed DMA.
        stream_kwargs = dict(pipeline_mode=pl.Buffered(buffer_depth))

    in_specs = [
        pl.BlockSpec((None, F_g, tile_hw), lambda n, j: (n, 0, j), **stream_kwargs),
        pl.BlockSpec((None, F_l, tile_hw), lambda n, j: (n, 0, j), **stream_kwargs),
        pl.BlockSpec((F_int, F_g), const),             # Wg^T
        pl.BlockSpec((F_int, F_l), const),             # Wx^T
        pl.BlockSpec(pslab.shape, const),              # packed small params
    ]
    operands = [g3, x3, wgT, wxT, pslab]
    if use_mxu_psi:
        in_specs.append(pl.BlockSpec((8, F_int), const))  # padded psi weight row
        operands.append(wp_pad)

    out3 = pl.pallas_call(
        kernel,
        out_shape=jax.ShapeDtypeStruct((N, F_l, HW), out_dt),
        grid_spec=pltpu.PrefetchScalarGridSpec(
            num_scalar_prefetch=0,
            grid=grid,
            in_specs=in_specs,
            out_specs=pl.BlockSpec((None, F_l, tile_hw), lambda n, j: (n, 0, j)),
        ),
        compiler_params=pltpu.CompilerParams(
            dimension_semantics=("parallel", "parallel"),
            vmem_limit_bytes=int(vmem_limit),
        ),
    )(*operands)

    return out3.reshape(N, F_l, H, W)                  # free reshape back to NCHW


# ---------------------------------------------------------------------------
# Pure-JAX reference (same folded-BN math) for a correctness check.
# ---------------------------------------------------------------------------
def attention_gate_ref(g, x, params):
    wg, bg = _fold_bn(params["wg"], params["bg"], params["bn_g_gamma"],
                      params["bn_g_beta"], params["bn_g_mean"], params["bn_g_var"])
    wx, bx = _fold_bn(params["wx"], params["bx"], params["bn_x_gamma"],
                      params["bn_x_beta"], params["bn_x_mean"], params["bn_x_var"])
    wp, bp = _fold_bn(params["wp"], params["bp"], params["bn_p_gamma"],
                      params["bn_p_beta"], params["bn_p_mean"], params["bn_p_var"])
    gn = jnp.transpose(g, (0, 2, 3, 1))
    xn = jnp.transpose(x, (0, 2, 3, 1))
    g1 = gn @ wg + bg
    x1 = xn @ wx + bx
    h = jnp.maximum(g1 + x1, 0.0)
    psi = jax.nn.sigmoid(h @ wp.reshape(-1, 1) + bp)
    out = xn * psi
    return jnp.transpose(out, (0, 3, 1, 2))


def make_params(key, F_g, F_l, F_int):
    ks = jax.random.split(key, 6)
    return {
        # conv weights stored as (Cin, Cout); PyTorch stores (Cout, Cin, 1, 1).
        "wg": 0.1 * jax.random.normal(ks[0], (F_g, F_int), jnp.float32),
        "bg": 0.1 * jax.random.normal(ks[1], (F_int,), jnp.float32),
        "wx": 0.1 * jax.random.normal(ks[2], (F_l, F_int), jnp.float32),
        "bx": 0.1 * jax.random.normal(ks[3], (F_int,), jnp.float32),
        "wp": 0.1 * jax.random.normal(ks[4], (F_int,), jnp.float32).reshape(F_int, 1),
        "bp": 0.1 * jax.random.normal(ks[5], (1,), jnp.float32),
        # BatchNorm (inference-mode) params -- deterministic, non-trivial.
        "bn_g_gamma": jnp.linspace(0.8, 1.2, F_int, dtype=jnp.float32),
        "bn_g_beta":  jnp.linspace(-0.1, 0.1, F_int, dtype=jnp.float32),
        "bn_g_mean":  jnp.linspace(-0.05, 0.05, F_int, dtype=jnp.float32),
        "bn_g_var":   jnp.linspace(0.9, 1.1, F_int, dtype=jnp.float32),
        "bn_x_gamma": jnp.linspace(1.1, 0.9, F_int, dtype=jnp.float32),
        "bn_x_beta":  jnp.linspace(0.1, -0.1, F_int, dtype=jnp.float32),
        "bn_x_mean":  jnp.linspace(0.05, -0.05, F_int, dtype=jnp.float32),
        "bn_x_var":   jnp.linspace(1.1, 0.9, F_int, dtype=jnp.float32),
        "bn_p_gamma": jnp.array([1.05], jnp.float32),
        "bn_p_beta":  jnp.array([0.02], jnp.float32),
        "bn_p_mean":  jnp.array([0.01], jnp.float32),
        "bn_p_var":   jnp.array([0.95], jnp.float32),
    }


if __name__ == "__main__":
    key = jax.random.PRNGKey(0)
    kg, kx, kp, kg2, kx2, kp2 = jax.random.split(key, 6)

    # --- small config (VPU psi path, f32 in / f32 out) ---------------------
    N, F_g, F_l, F_int, H, W = 2, 4, 4, 8, 16, 16
    g = jax.random.normal(kg, (N, F_g, H, W), jnp.float32)   # gating signal (NCHW)
    x = jax.random.normal(kx, (N, F_l, H, W), jnp.float32)   # skip features (NCHW)
    params = make_params(kp, F_g, F_l, F_int)

    out = jax.block_until_ready(attention_gate(g, x, params))
    ref = attention_gate_ref(g, x, params)
    assert out.shape == x.shape and out.dtype == x.dtype
    assert jnp.allclose(out, ref, atol=1e-5, rtol=1e-5), "mismatch vs reference (f32)"

    # bf16 storage + (default) bf16 output: halves input reads, cuts the
    # output-write stream.  Looser tolerance.
    out_bf16 = jax.block_until_ready(
        attention_gate(g, x, params, storage_dtype=jnp.bfloat16))
    assert out_bf16.shape == x.shape and out_bf16.dtype == jnp.bfloat16
    assert float(jnp.max(jnp.abs(out_bf16.astype(jnp.float32) - ref))) < 0.12, \
        "bf16 variant too far from reference"

    # --- wider config (MXU psi path), batch 1 exercises the >=4-step grid --
    N2, Fg2, Fl2, Fi2, H2, W2 = 1, 8, 8, 64, 16, 16
    g2 = jax.random.normal(kg2, (N2, Fg2, H2, W2), jnp.float32)
    x2 = jax.random.normal(kx2, (N2, Fl2, H2, W2), jnp.float32)
    params2 = make_params(kp2, Fg2, Fl2, Fi2)
    out2 = jax.block_until_ready(attention_gate(g2, x2, params2))
    ref2 = attention_gate_ref(g2, x2, params2)
    assert out2.shape == x2.shape
    assert jnp.allclose(out2, ref2, atol=1e-4, rtol=1e-4), "mismatch (MXU psi path)"

    print("KERNEL_OK")
</pallas_src>

<mosaic_0001>
module attributes {stable_mosaic.version = 11 : i64} {
  func.func @_attention_gate_kernel_vpu_psi(%arg0: i32, %arg1: i32, %arg2: memref<1x4x128xf32, #tpu.memory_space<vmem>>, %arg3: memref<1x4x128xf32, #tpu.memory_space<vmem>>, %arg4: memref<8x4xf32, #tpu.memory_space<vmem>>, %arg5: memref<8x4xf32, #tpu.memory_space<vmem>>, %arg6: memref<8x3xf32, #tpu.memory_space<vmem>>, %arg7: memref<1x4x128xf32, #tpu.memory_space<vmem>>) attributes {dimension_semantics = [#tpu.dimension_semantics<parallel>, #tpu.dimension_semantics<parallel>], iteration_bounds = array<i64: 2, 2>, scalar_prefetch = 0 : i64, scratch_operands = 0 : i64, tpu.core_type = #tpu.core_type<tc>, window_params = [{transform_indices = @transform_0, window_bounds = array<i64: 1, 4, 128>}, {transform_indices = @transform_1, window_bounds = array<i64: 1, 4, 128>}, {pipeline_mode = #tpu.pipeline_mode<synchronous>, transform_indices = @transform_2, window_bounds = array<i64: 8, 4>}, {pipeline_mode = #tpu.pipeline_mode<synchronous>, transform_indices = @transform_3, window_bounds = array<i64: 8, 4>}, {pipeline_mode = #tpu.pipeline_mode<synchronous>, transform_indices = @transform_4, window_bounds = array<i64: 8, 3>}, {transform_indices = @transform_5, window_bounds = array<i64: 1, 4, 128>}]} {
    %c0 = arith.constant 0 : index
    %c0_0 = arith.constant 0 : index
    %c0_1 = arith.constant 0 : index
    %0 = vector.load %arg2[%c0, %c0_0, %c0_1] : memref<1x4x128xf32, #tpu.memory_space<vmem>>, vector<1x4x128xf32>
    %1 = vector.shape_cast %0 : vector<1x4x128xf32> to vector<4x128xf32>
    %c0_2 = arith.constant 0 : index
    %c0_3 = arith.constant 0 : index
    %c0_4 = arith.constant 0 : index
    %2 = vector.load %arg3[%c0_2, %c0_3, %c0_4] : memref<1x4x128xf32, #tpu.memory_space<vmem>>, vector<1x4x128xf32>
    %3 = vector.shape_cast %2 : vector<1x4x128xf32> to vector<4x128xf32>
    %c0_5 = arith.constant 0 : index
    %c0_6 = arith.constant 0 : index
    %4 = vector.load %arg4[%c0_5, %c0_6] : memref<8x4xf32, #tpu.memory_space<vmem>>, vector<8x4xf32>
    %cst = arith.constant dense<0.000000e+00> : vector<8x128xf32>
    %5 = tpu.matmul %4, %1, %cst {dimension_numbers = #tpu.dot_dimension_numbers<[1], [0], [0], [1], [0, 0, 1, 1], [], []>} : vector<8x4xf32>, vector<4x128xf32>, vector<8x128xf32> -> vector<8x128xf32>
    %c0_7 = arith.constant 0 : index
    %c0_8 = arith.constant 0 : index
    %6 = vector.load %arg5[%c0_7, %c0_8] : memref<8x4xf32, #tpu.memory_space<vmem>>, vector<8x4xf32>
    %cst_9 = arith.constant dense<0.000000e+00> : vector<8x128xf32>
    %7 = tpu.matmul %6, %3, %cst_9 {dimension_numbers = #tpu.dot_dimension_numbers<[1], [0], [0], [1], [0, 0, 1, 1], [], []>} : vector<8x4xf32>, vector<4x128xf32>, vector<8x128xf32> -> vector<8x128xf32>
    %8 = arith.addf %5, %7 : vector<8x128xf32>
    %c0_10 = arith.constant 0 : index
    %c0_11 = arith.constant 0 : index
    %9 = vector.load %arg6[%c0_10, %c0_11] : memref<8x3xf32, #tpu.memory_space<vmem>>, vector<8x1xf32>
    %10 = vector.broadcast %9 : vector<8x1xf32> to vector<8x128xf32>
    %11 = arith.addf %8, %10 : vector<8x128xf32>
    %cst_12 = arith.constant 0.000000e+00 : f32
    %12 = vector.broadcast %cst_12 : f32 to vector<8x128xf32>
    %13 = arith.maximumf %11, %12 : vector<8x128xf32>
    %c0_13 = arith.constant 0 : index
    %c1 = arith.constant 1 : index
    %14 = vector.load %arg6[%c0_13, %c1] : memref<8x3xf32, #tpu.memory_space<vmem>>, vector<8x1xf32>
    %15 = vector.broadcast %14 : vector<8x1xf32> to vector<8x128xf32>
    %16 = arith.mulf %13, %15 : vector<8x128xf32>
    %cst_14 = arith.constant dense<0.000000e+00> : vector<128xf32>
    %17 = vector.multi_reduction <add>, %16, %cst_14 [0] : vector<8x128xf32> to vector<128xf32>
    %18 = vector.shape_cast %17 : vector<128xf32> to vector<1x128xf32>
    %c0_15 = arith.constant 0 : index
    %c2 = arith.constant 2 : index
    %19 = vector.load %arg6[%c0_15, %c2] : memref<8x3xf32, #tpu.memory_space<vmem>>, vector<1x1xf32>
    %20 = vector.broadcast %19 : vector<1x1xf32> to vector<1x128xf32>
    %21 = arith.addf %18, %20 : vector<1x128xf32>
    %22 = arith.negf %21 : vector<1x128xf32>
    %23 = math.exp %22 : vector<1x128xf32>
    %cst_16 = arith.constant 1.000000e+00 : f32
    %24 = vector.broadcast %cst_16 : f32 to vector<1x128xf32>
    %25 = arith.addf %24, %23 : vector<1x128xf32>
    %26 = arith.divf %24, %25 : vector<1x128xf32>
    %27 = vector.broadcast %26 : vector<1x128xf32> to vector<4x128xf32>
    %28 = arith.mulf %3, %27 : vector<4x128xf32>
    %c0_17 = arith.constant 0 : index
    %c0_18 = arith.constant 0 : index
    %c0_19 = arith.constant 0 : index
    %29 = vector.load %arg7[%c0_17, %c0_18, %c0_19] : memref<1x4x128xf32, #tpu.memory_space<vmem>>, vector<1x4x128xf32>
    %30 = vector.shape_cast %29 : vector<1x4x128xf32> to vector<4x128xf32>
    %31 = vector.shape_cast %28 : vector<4x128xf32> to vector<1x4x128xf32>
    tpu.vector_store %arg7[%c0_17, %c0_18, %c0_19], %31 {strides = array<i32>} : memref<1x4x128xf32, #tpu.memory_space<vmem>>, vector<1x4x128xf32>,
    return
  }
  func.func @transform_0(%arg0: i32, %arg1: i32) -> (i32, i32, i32) {
    %c0_i32 = arith.constant 0 : i32
    %c0_i32_0 = arith.constant 0 : i32
    return %arg0, %c0_i32, %arg1 : i32, i32, i32
  }
  func.func @transform_1(%arg0: i32, %arg1: i32) -> (i32, i32, i32) {
    %c0_i32 = arith.constant 0 : i32
    %c0_i32_0 = arith.constant 0 : i32
    return %arg0, %c0_i32, %arg1 : i32, i32, i32
  }
  func.func @transform_2(%arg0: i32, %arg1: i32) -> (i32, i32) {
    %c0_i32 = arith.constant 0 : i32
    %c0_i32_0 = arith.constant 0 : i32
    %c0_i32_1 = arith.constant 0 : i32
    return %c0_i32, %c0_i32_0 : i32, i32
  }
  func.func @transform_3(%arg0: i32, %arg1: i32) -> (i32, i32) {
    %c0_i32 = arith.constant 0 : i32
    %c0_i32_0 = arith.constant 0 : i32
    %c0_i32_1 = arith.constant 0 : i32
    return %c0_i32, %c0_i32_0 : i32, i32
  }
  func.func @transform_4(%arg0: i32, %arg1: i32) -> (i32, i32) {
    %c0_i32 = arith.constant 0 : i32
    %c0_i32_0 = arith.constant 0 : i32
    %c0_i32_1 = arith.constant 0 : i32
    return %c0_i32, %c0_i32_0 : i32, i32
  }
  func.func @transform_5(%arg0: i32, %arg1: i32) -> (i32, i32, i32) {
    %c0_i32 = arith.constant 0 : i32
    %c0_i32_0 = arith.constant 0 : i32
    return %arg0, %c0_i32, %arg1 : i32, i32, i32
  }
}

</mosaic_0001>

<llo_original>
// kernel: tpu_custom_call.1
$region0: #{tpu_custom_call.1}
  #allocation0 [shape = 'u32[]', space=smem, size = 0x4, offset = 0x4, fixed_abs, tag = 'smem constant byte address 0x4 - core index']
  #allocation1 [shape = 'u32[144,128]{1,0:T(1,128)}', space=vmem, size = 0x12000, scoped, tag = 'internal scratch']
  %s0 = inlined_call_operand.vmem [shape: f32[2,4,256], index: 0, kind: input, shape index: {}]
  %s1 = inlined_call_operand.vmem [shape: f32[2,4,256], index: 1, kind: input, shape index: {}]
  %s2 = inlined_call_operand.vmem [shape: f32[8,4], index: 2, kind: input, shape index: {}]
  %s3 = inlined_call_operand.vmem [shape: f32[8,4], index: 3, kind: input, shape index: {}]
  %s4 = inlined_call_operand.vmem [shape: f32[8,3], index: 4, kind: input, shape index: {}]
  %s5 = inlined_call_operand.hbm [shape: f32[2,4,256], index: 5, kind: output, shape index: {}]
  %s6 = sld [smem:[#allocation0]]
  $region53: #{tpu_custom_call.1} parent=0
    _
  %s8 = ssub.s32 1, %s6
  %s9 = scalar_select 0, %s8, %s6
  $region1: #{tpu_custom_call.1} parent=0
    #allocation2 [shape = 'u8[4096]{0}', space=vmem, size = 0x1000, scoped, tag = 'output window, operand 0']
    #allocation3 [shape = 's32[2]{0}', space=sflag, size = 0x8, scoped, tag = 'scoped memory for tpu_custom_call.1']
    %10 = vsyncpa [#allocation3], 0
    %s11 = scalar_lea.sflag [#allocation3], 1
    %12 = vsyncpa %s11, 0
    loop: start=0, step=1, limit=6
    $region2: #{tpu_custom_call.1} parent=1 // loop_pre_header
      _
    $region3: #{tpu_custom_call.1} parent=1 // loop_header
      %s14 = sphi 0, %s18
      %p15 = scmp.ge.s32.totalorder %s14, 6
      %s21 = sphi 0, %s33
      %s22 = sphi 0, %s29
      %s23 = sphi 0, %s21
      %s24 = sphi 0, %s22
      %s25 = sphi 0, %s23
      %s26 = sphi 0, %s24
      %s38 = sphi 0, %s40
      %s41 = sphi 0, %s38
      %s42 = sphi 0, %s41
      %s58 = sphi 0, %s42
      %s66 = sphi 0, %s68
      %s69 = sphi 0, %s66
      %s70 = sphi 0, %s69
      %s86 = sphi 0, %s70
      %s90 = sphi 0, %s90
      %s92 = sphi 0, %s90
      %s93 = sphi 0, %s92
      %s107 = sphi 0, %s93
      %s111 = sphi 0, %s111
      %s113 = sphi 0, %s111
      %s114 = sphi 0, %s113
      %s128 = sphi 0, %s114
      %s132 = sphi 0, %s132
      %s134 = sphi 0, %s132
      %s135 = sphi 0, %s134
      %s149 = sphi 0, %s135
      %s157 = sphi 0, %s159
      %s160 = sphi 0, %s157
      %s161 = sphi 0, %s160
      %s177 = sphi 0, %s161
    $region4: #{tpu_custom_call.1} parent=1 // loop_header_branch
      %17 = sbr.rel (%p15) target = $region8
    $region5: #{tpu_custom_call.1} parent=1 // loop_body
      %s19 = ssub.s32 %s14, 1
      %s20 = ssub.s32 %s14, 2
      %s27 = sadd.s32 1, %s22
      %p28 = scmp.ge.s32.totalorder %s27, 2
      %s29 = scalar_select %p28, 0, %s27
      %s30 = sadd.s32 1, %s21
      %s31 = scalar_select %p28, %s30, %s21
      %p32 = scmp.ge.s32.totalorder %s31, 2
      %s33 = scalar_select %p32, 0, %s31
      %s34 = ssub.s32 %s21, %s33
      %s35 = ssub.s32 %s22, %s29
      %s36 = sor.u32 %s34, %s35
      %p37 = scmp.eq.s32.totalorder %s36, 0
      %s39 = sadd.s32 %s38, 1
      %s40 = scalar_select %p37, %s38, %s39
      %p43 = pneg %p37
      %p44 = scmp.eq.s32.totalorder %s14, 3
      %p45 = por %p43, %p44
      %p46 = scmp.ne.s32.totalorder %s38, %s41
      %p47 = scmp.eq.s32.totalorder %s14, 0
      %p48 = por %p46, %p47
      %p49 = scmp.ne.s32.totalorder %s38, %s41
      %p50 = scmp.eq.s32.totalorder %s19, 3
      %p51 = por %p49, %p50
      %p52 = scmp.ne.s32.totalorder %s41, %s42
      %p53 = scmp.eq.s32.totalorder %s19, 0
      %p54 = por %p52, %p53
      %p55 = scmp.ne.s32.totalorder %s41, %s42
      %p56 = scmp.eq.s32.totalorder %s20, 3
      %p57 = por %p55, %p56
      %p59 = scmp.ne.s32.totalorder %s42, %s58
      %p60 = scmp.eq.s32.totalorder %s20, 0
      %p61 = por %p59, %p60
      %s62 = ssub.s32 %s21, %s33
      %s63 = ssub.s32 %s22, %s29
      %s64 = sor.u32 %s62, %s63
      %p65 = scmp.eq.s32.totalorder %s64, 0
      %s67 = sadd.s32 %s66, 1
      %s68 = scalar_select %p65, %s66, %s67
      %p71 = pneg %p65
      %p72 = scmp.eq.s32.totalorder %s14, 3
      %p73 = por %p71, %p72
      %p74 = scmp.ne.s32.totalorder %s66, %s69
      %p75 = scmp.eq.s32.totalorder %s14, 0
      %p76 = por %p74, %p75
      %p77 = scmp.ne.s32.totalorder %s66, %s69
      %p78 = scmp.eq.s32.totalorder %s19, 3
      %p79 = por %p77, %p78
      %p80 = scmp.ne.s32.totalorder %s69, %s70
      %p81 = scmp.eq.s32.totalorder %s19, 0
      %p82 = por %p80, %p81
      %p83 = scmp.ne.s32.totalorder %s69, %s70
      %p84 = scmp.eq.s32.totalorder %s20, 3
      %p85 = por %p83, %p84
      %p87 = scmp.ne.s32.totalorder %s70, %s86
      %p88 = scmp.eq.s32.totalorder %s20, 0
      %p89 = por %p87, %p88
      %s91 = sadd.s32 %s90, 1
      %p94 = scmp.eq.s32.totalorder %s14, 3
      %p95 = scmp.ne.s32.totalorder %s90, %s92
      %p96 = scmp.eq.s32.totalorder %s14, 0
      %p97 = por %p95, %p96
      %p98 = scmp.ne.s32.totalorder %s90, %s92
      %p99 = scmp.eq.s32.totalorder %s19, 3
      %p100 = por %p98, %p99
      %p101 = scmp.ne.s32.totalorder %s92, %s93
      %p102 = scmp.eq.s32.totalorder %s19, 0
      %p103 = por %p101, %p102
      %p104 = scmp.ne.s32.totalorder %s92, %s93
      %p105 = scmp.eq.s32.totalorder %s20, 3
      %p106 = por %p104, %p105
      %p108 = scmp.ne.s32.totalorder %s93, %s107
      %p109 = scmp.eq.s32.totalorder %s20, 0
      %p110 = por %p108, %p109
      %s112 = sadd.s32 %s111, 1
      %p115 = scmp.eq.s32.totalorder %s14, 3
      %p116 = scmp.ne.s32.totalorder %s111, %s113
      %p117 = scmp.eq.s32.totalorder %s14, 0
      %p118 = por %p116, %p117
      %p119 = scmp.ne.s32.totalorder %s111, %s113
      %p120 = scmp.eq.s32.totalorder %s19, 3
      %p121 = por %p119, %p120
      %p122 = scmp.ne.s32.totalorder %s113, %s114
      %p123 = scmp.eq.s32.totalorder %s19, 0
      %p124 = por %p122, %p123
      %p125 = scmp.ne.s32.totalorder %s113, %s114
      %p126 = scmp.eq.s32.totalorder %s20, 3
      %p127 = por %p125, %p126
      %p129 = scmp.ne.s32.totalorder %s114, %s128
      %p130 = scmp.eq.s32.totalorder %s20, 0
      %p131 = por %p129, %p130
      %s133 = sadd.s32 %s132, 1
      %p136 = scmp.eq.s32.totalorder %s14, 3
      %p137 = scmp.ne.s32.totalorder %s132, %s134
      %p138 = scmp.eq.s32.totalorder %s14, 0
      %p139 = por %p137, %p138
      %p140 = scmp.ne.s32.totalorder %s132, %s134
      %p141 = scmp.eq.s32.totalorder %s19, 3
      %p142 = por %p140, %p141
      %p143 = scmp.ne.s32.totalorder %s134, %s135
      %p144 = scmp.eq.s32.totalorder %s19, 0
      %p145 = por %p143, %p144
      %p146 = scmp.ne.s32.totalorder %s134, %s135
      %p147 = scmp.eq.s32.totalorder %s20, 3
      %p148 = por %p146, %p147
      %p150 = scmp.ne.s32.totalorder %s135, %s149
      %p151 = scmp.eq.s32.totalorder %s20, 0
      %p152 = por %p150, %p151
      %s153 = ssub.s32 %s21, %s33
      %s154 = ssub.s32 %s22, %s29
      %s155 = sor.u32 %s153, %s154
      %p156 = scmp.eq.s32.totalorder %s155, 0
      %s158 = sadd.s32 %s157, 1
      %s159 = scalar_select %p156, %s157, %s158
      %p162 = pneg %p156
      %p163 = scmp.eq.s32.totalorder %s14, 3
      %p164 = por %p162, %p163
      %p165 = scmp.ne.s32.totalorder %s157, %s160
      %p166 = scmp.eq.s32.totalorder %s14, 0
      %p167 = por %p165, %p166
      %p168 = scmp.ne.s32.totalorder %s157, %s160
      %p169 = scmp.eq.s32.totalorder %s19, 3
      %p170 = por %p168, %p169
      %p171 = scmp.ne.s32.totalorder %s160, %s161
      %p172 = scmp.eq.s32.totalorder %s19, 0
      %p173 = por %p171, %p172
      %p174 = scmp.ne.s32.totalorder %s160, %s161
      %p175 = scmp.eq.s32.totalorder %s20, 3
      %p176 = por %p174, %p175
      %p178 = scmp.ne.s32.totalorder %s161, %s177
      %p179 = scmp.eq.s32.totalorder %s20, 0
      %p180 = por %p178, %p179
      %p181 = scmp.le.s32.totalorder 1, %s14
      %p182 = scmp.lt.s32.totalorder %s14, 5
      %p183 = pnand %p181, %p182
      %p184 = pneg %p183
      // Predicated region
      $region9: #{tpu_custom_call.1} parent=5 // pred_check
        _
      $region10: #{tpu_custom_call.1} parent=5 // pred_check_branch
        %186 = sbr.rel (%p183) target = $region12
      $region11: #{tpu_custom_call.1} parent=5 // pred_region
        %s187 = ssub.s32 %s14, 1
        // Predicated region
        $region13: #{tpu_custom_call.1} parent=11 // pred_check
          %p188 = pneg %p103
        $region14: #{tpu_custom_call.1} parent=11 // pred_check_branch
          %190 = sbr.rel (%p188) target = $region16
        $region15: #{tpu_custom_call.1} parent=11 // pred_region
          _
        $region16: #{tpu_custom_call.1} parent=11 // pred_fallthru
          _
        // Predicated region
        $region17: #{tpu_custom_call.1} parent=11 // pred_check
          %p191 = pneg %p124
        $region18: #{tpu_custom_call.1} parent=11 // pred_check_branch
          %193 = sbr.rel (%p191) target = $region20
        $region19: #{tpu_custom_call.1} parent=11 // pred_region
          _
        $region20: #{tpu_custom_call.1} parent=11 // pred_fallthru
          _
        // Predicated region
        $region21: #{tpu_custom_call.1} parent=11 // pred_check
          %p194 = pneg %p145
        $region22: #{tpu_custom_call.1} parent=11 // pred_check_branch
          %196 = sbr.rel (%p194) target = $region24
        $region23: #{tpu_custom_call.1} parent=11 // pred_region
          _
        $region24: #{tpu_custom_call.1} parent=11 // pred_fallthru
          _
      $region12: #{tpu_custom_call.1} parent=5 // pred_fallthru
        _
      %p197 = scmp.lt.s32.totalorder %s14, 4
      // Predicated region
      $region25: #{tpu_custom_call.1} parent=5 // pred_check
        %p198 = pneg %p197
      $region26: #{tpu_custom_call.1} parent=5 // pred_check_branch
        %200 = sbr.rel (%p198) target = $region28
      $region27: #{tpu_custom_call.1} parent=5 // pred_region
        // Predicated region
        $region29: #{tpu_custom_call.1} parent=27 // pred_check
          %p201 = pneg %p48
        $region30: #{tpu_custom_call.1} parent=27 // pred_check_branch
          %203 = sbr.rel (%p201) target = $region32
        $region31: #{tpu_custom_call.1} parent=27 // pred_region
          %p204 = scmp.lt.s32.totalorder %s21, 1
          %s205 = scalar_select %p204, %s21, 1
          %p206 = scmp.lt.s32.totalorder %s22, 1
          %s207 = scalar_select %p206, %s22, 1
          %s208 = smul.addr %s205, 2
          %s209 = sadd.s32 %s207, %s208
          %s210 = smul.addr %s209, 4
          %s211 = scalar_lea.vmem %s0, %s210
        $region32: #{tpu_custom_call.1} parent=27 // pred_fallthru
          _
        // Predicated region
        $region33: #{tpu_custom_call.1} parent=27 // pred_check
          %p212 = pneg %p76
        $region34: #{tpu_custom_call.1} parent=27 // pred_check_branch
          %214 = sbr.rel (%p212) target = $region36
        $region35: #{tpu_custom_call.1} parent=27 // pred_region
          %p215 = scmp.lt.s32.totalorder %s21, 1
          %s216 = scalar_select %p215, %s21, 1
          %p217 = scmp.lt.s32.totalorder %s22, 1
          %s218 = scalar_select %p217, %s22, 1
          %s219 = smul.addr %s216, 2
          %s220 = sadd.s32 %s218, %s219
          %s221 = smul.addr %s220, 4
          %s222 = scalar_lea.vmem %s1, %s221
        $region36: #{tpu_custom_call.1} parent=27 // pred_fallthru
          _
      $region28: #{tpu_custom_call.1} parent=5 // pred_fallthru
        _
      %p223 = scmp.le.s32.totalorder 1, %s14
      %p224 = scmp.lt.s32.totalorder %s14, 5
      %p225 = pnand %p223, %p224
      %p226 = pneg %p225
      // Predicated region
      $region37: #{tpu_custom_call.1} parent=5 // pred_check
        _
      $region38: #{tpu_custom_call.1} parent=5 // pred_check_branch
        %228 = sbr.rel (%p225) target = $region40
      $region39: #{tpu_custom_call.1} parent=5 // pred_region
        %s229 = ssub.s32 %s14, 1
        %p230 = scmp.lt.s32.totalorder %s23, 1
        %s231 = scalar_select %p230, %s23, 1
        %p232 = scmp.lt.s32.totalorder %s24, 1
        %s233 = scalar_select %p232, %s24, 1
        %s234 = smul.addr %s231, 2
        %s235 = sadd.s32 %s233, %s234
        %s236 = smul.addr %s235, 4
        %s237 = scalar_lea.vmem %s0, %s236
        %p238 = pneg %p54
        %p239 = pneg %p51
        %p240 = scmp.lt.s32.totalorder %s23, 1
        %s241 = scalar_select %p240, %s23, 1
        %p242 = scmp.lt.s32.totalorder %s24, 1
        %s243 = scalar_select %p242, %s24, 1
        %s244 = smul.addr %s241, 2
        %s245 = sadd.s32 %s243, %s244
        %s246 = smul.addr %s245, 4
        %s247 = scalar_lea.vmem %s1, %s246
        %p248 = pneg %p82
        %p249 = pneg %p79
        %p250 = pneg %p103
        %p251 = pneg %p100
        %p252 = pneg %p124
        %p253 = pneg %p121
        %p254 = pneg %p145
        %p255 = pneg %p142
        %p256 = pneg %p173
        %p257 = pneg %p170
        %s258 = sand.u32 %s160, 1
        %s259 = scalar_lea.sflag [#allocation3], %s258
        %s260 = sand.u32 %s160, 1
        %s261 = smul.addr %s260, 4
        %s262 = scalar_lea.vmem [#allocation2], %s261
        %p263 = scmp.lt.s32.totalorder %s23, 1
        %s264 = scalar_select %p263, %s23, 1
        %p265 = scmp.lt.s32.totalorder %s24, 1
        %s266 = scalar_select %p265, %s24, 1
        %s267 = smul.addr %s264, 2
        %s268 = sadd.s32 %s266, %s267
        %s269 = smul.addr %s268, 4
        %s270 = scalar_lea.vmem %s0, %s269
        %p271 = scmp.lt.s32.totalorder %s23, 1
        %s272 = scalar_select %p271, %s23, 1
        %p273 = scmp.lt.s32.totalorder %s24, 1
        %s274 = scalar_select %p273, %s24, 1
        %s275 = smul.addr %s272, 2
        %s276 = sadd.s32 %s274, %s275
        %s277 = smul.addr %s276, 4
        %s278 = scalar_lea.vmem %s1, %s277
        %v279 = vld [vmem:[%s270] sm:$0xf]
        %v280 = vld [vmem:[%s278] sm:$0xf]
        %v281 = vld [vmem:[%s2] sm:$0xff]
        %v282 = vld [vmem:[%s3] sm:$0xff]
        %vm283 = vcmask 31744
        %v285 = vsel %vm283, %v282, 0
        %vm287 = vcmask 1043456
        %v289 = vsel %vm287, %v280, 0
        %291 = vmatprep.subr.mxu0 0.0
        %292 = vmatpush1.msra.mxu0 0.0
        %293 = vmatprep.subr.mxu0 0.0
        %294 = vmatpush1.msra.mxu0 0.0
        %295 = vmatprep.subr.mxu0 0.0
        %296 = vmatpush1.msra.mxu0 0.0
        %297 = vmatprep.subr.mxu0 0.0
        %298 = vmatpush1.msra.mxu0 0.0
        %299 = vmatprep.subr.mxu0 0.0
        %300 = vmatpush1.msra.mxu0 0.0
        %301 = vmatprep.subr.mxu0 0.0
        %302 = vmatpush1.msra.mxu0 0.0
        %303 = vmatprep.subr.mxu0 0.0
        %304 = vmatpush1.msra.mxu0 0.0
        %305 = vmatprep.subr.mxu0 0.0
        %306 = vmatpush1.msra.mxu0 0.0
        %307 = vmatprep.subr.mxu0 0.0
        %308 = vmatpush1.msra.mxu0 0.0
        %309 = vmatprep.subr.mxu0 0.0
        %310 = vmatpush1.msra.mxu0 0.0
        %311 = vmatprep.subr.mxu0 0.0
        %312 = vmatpush1.msra.mxu0 0.0
        %313 = vmatprep.subr.mxu0 0.0
        %314 = vmatpush1.msra.mxu0 0.0
        %315 = vmatprep.subr.mxu0 0.0
        %316 = vmatpush1.msra.mxu0 0.0
        %317 = vmatprep.subr.mxu0 0.0
        %318 = vmatpush1.msra.mxu0 0.0
        %319 = vmatprep.subr.mxu0 0.0
        %320 = vmatpush1.msra.mxu0 0.0
        %321 = vmatprep.subr.mxu0 0.0
        %322 = vmatpush1.msra.mxu0 %v289
        %323 = vmatprep.subr.mxu0 0.0
        %324 = vmatpush2.msra.mxu0 0.0
        %325 = vmatprep.subr.mxu0 0.0
        %326 = vmatpush2.msra.mxu0 0.0
        %327 = vmatprep.subr.mxu0 0.0
        %328 = vmatpush2.msra.mxu0 0.0
        %329 = vmatprep.subr.mxu0 0.0
        %330 = vmatpush2.msra.mxu0 0.0
        %331 = vmatprep.subr.mxu0 0.0
        %332 = vmatpush2.msra.mxu0 0.0
        %333 = vmatprep.subr.mxu0 0.0
        %334 = vmatpush2.msra.mxu0 0.0
        %335 = vmatprep.subr.mxu0 0.0
        %336 = vmatpush2.msra.mxu0 0.0
        %337 = vmatprep.subr.mxu0 0.0
        %338 = vmatpush2.msra.mxu0 0.0
        %339 = vmatprep.subr.mxu0 0.0
        %340 = vmatpush2.msra.mxu0 0.0
        %341 = vmatprep.subr.mxu0 0.0
        %342 = vmatpush2.msra.mxu0 0.0
        %343 = vmatprep.subr.mxu0 0.0
        %344 = vmatpush2.msra.mxu0 0.0
        %345 = vmatprep.subr.mxu0 0.0
        %346 = vmatpush2.msra.mxu0 0.0
        %347 = vmatprep.subr.mxu0 0.0
        %348 = vmatpush2.msra.mxu0 0.0
        %349 = vmatprep.subr.mxu0 0.0
        %350 = vmatpush2.msra.mxu0 0.0
        %351 = vmatprep.subr.mxu0 0.0
        %352 = vmatpush2.msra.mxu0 0.0
        %353 = vmatprep.subr.mxu0 0.0
        %354 = vmatpush2.msra.mxu0 0.0
        %355 = vmatprep.mubr.f32.mxu0 0.0
        %356 = vmatmul.mubr.f32.gmra.mxu0 %v285
        %v357 = vpop.f32.mrf.mxu0
        %v358 = vadd.f32 0.0, %v357
        %v359 = vpop.f32.mrf.mxu0
        %360 = vdwg.mxu0
        %v362 = vsel %vm283, %v281, 0
        %v365 = vsel %vm287, %v279, 0
        %367 = vmatprep.subr.mxu0 0.0
        %368 = vmatpush1.msra.mxu0 0.0
        %369 = vmatprep.subr.mxu0 0.0
        %370 = vmatpush1.msra.mxu0 0.0
        %371 = vmatprep.subr.mxu0 0.0
        %372 = vmatpush1.msra.mxu0 0.0
        %373 = vmatprep.subr.mxu0 0.0
        %374 = vmatpush1.msra.mxu0 0.0
        %375 = vmatprep.subr.mxu0 0.0
        %376 = vmatpush1.msra.mxu0 0.0
        %377 = vmatprep.subr.mxu0 0.0
        %378 = vmatpush1.msra.mxu0 0.0
        %379 = vmatprep.subr.mxu0 0.0
        %380 = vmatpush1.msra.mxu0 0.0
        %381 = vmatprep.subr.mxu0 0.0
        %382 = vmatpush1.msra.mxu0 0.0
        %383 = vmatprep.subr.mxu0 0.0
        %384 = vmatpush1.msra.mxu0 0.0
        %385 = vmatprep.subr.mxu0 0.0
        %386 = vmatpush1.msra.mxu0 0.0
        %387 = vmatprep.subr.mxu0 0.0
        %388 = vmatpush1.msra.mxu0 0.0
        %389 = vmatprep.subr.mxu0 0.0
        %390 = vmatpush1.msra.mxu0 0.0
        %391 = vmatprep.subr.mxu0 0.0
        %392 = vmatpush1.msra.mxu0 0.0
        %393 = vmatprep.subr.mxu0 0.0
        %394 = vmatpush1.msra.mxu0 0.0
        %395 = vmatprep.subr.mxu0 0.0
        %396 = vmatpush1.msra.mxu0 0.0
        %397 = vmatprep.subr.mxu0 0.0
        %398 = vmatpush1.msra.mxu0 %v365
        %399 = vmatprep.subr.mxu0 0.0
        %400 = vmatpush2.msra.mxu0 0.0
        %401 = vmatprep.subr.mxu0 0.0
        %402 = vmatpush2.msra.mxu0 0.0
        %403 = vmatprep.subr.mxu0 0.0
        %404 = vmatpush2.msra.mxu0 0.0
        %405 = vmatprep.subr.mxu0 0.0
        %406 = vmatpush2.msra.mxu0 0.0
        %407 = vmatprep.subr.mxu0 0.0
        %408 = vmatpush2.msra.mxu0 0.0
        %409 = vmatprep.subr.mxu0 0.0
        %410 = vmatpush2.msra.mxu0 0.0
        %411 = vmatprep.subr.mxu0 0.0
        %412 = vmatpush2.msra.mxu0 0.0
        %413 = vmatprep.subr.mxu0 0.0
        %414 = vmatpush2.msra.mxu0 0.0
        %415 = vmatprep.subr.mxu0 0.0
        %416 = vmatpush2.msra.mxu0 0.0
        %417 = vmatprep.subr.mxu0 0.0
        %418 = vmatpush2.msra.mxu0 0.0
        %419 = vmatprep.subr.mxu0 0.0
        %420 = vmatpush2.msra.mxu0 0.0
        %421 = vmatprep.subr.mxu0 0.0
        %422 = vmatpush2.msra.mxu0 0.0
        %423 = vmatprep.subr.mxu0 0.0
        %424 = vmatpush2.msra.mxu0 0.0
        %425 = vmatprep.subr.mxu0 0.0
        %426 = vmatpush2.msra.mxu0 0.0
        %427 = vmatprep.subr.mxu0 0.0
        %428 = vmatpush2.msra.mxu0 0.0
        %429 = vmatprep.subr.mxu0 0.0
        %430 = vmatpush2.msra.mxu0 0.0
        %431 = vmatprep.mubr.f32.mxu0 0.0
        %432 = vmatmul.mubr.f32.gmra.mxu0 %v362
        %v433 = vpop.f32.mrf.mxu0
        %v434 = vadd.f32 %v358, %v433
        %v435 = vpop.f32.mrf.mxu0
        %436 = vdwg.mxu0
        %v437 = vld [vmem:[%s4] sm:$0xff]
        %439 = vset.pattern.permute.xlu0 0
        %440 = vperm.xlu0 %439, %v437
        %v441 = vpop.permute.xlu0 %440
        %v443 = vadd.f32 %v434, %v441
        %v444 = vmax.f32 %v443, 0.0
        %445 = vset.pattern.permute.xlu0 1
        %446 = vperm.xlu0 %445, %v437
        %v447 = vpop.permute.xlu0 %446
        %v449 = vmul.f32 %v444, %v447
        %v450 = vrot.slane %v449, 4
        %v451 = vadd.f32 %v449, %v450
        %v452 = vrot.slane %v451, 2
        %v453 = vadd.f32 %v451, %v452
        %v454 = vrot.slane %v453, 1
        %v455 = vadd.f32 %v453, %v454
        %v456 = vld [vmem:[%s4] sm:$0x1]
        %458 = vset.pattern.permute.xlu0 2
        %459 = vperm.xlu0 %458, %v456
        %v460 = vpop.permute.xlu0 %459
        %v462 = vadd.f32 %v455, %v460
        %v463 = vxor.u32 %v462, 2147483648
        %v464 = vmul.f32 %v463, 1.442695
        %v465 = vpow.pop %v464
        %v466 = vadd.f32 %v465, 1.0
        %v467 = vrcp.pop %v466
        %v468 = vmul.f32 1.0, %v467
        %v469 = vlaneseq
        %v470 = vshrl.u32 %v469, 7
        %v471 = vsub.s32 0, %v470
        %v472 = vrot.slane %v468, %v471
        %v473 = vmul.f32 %v280, %v472
        %474 = vst [vmem:[%s262] sm:$0xf] %v473
        %s475 = sand.u32 %s160, 1
        %s476 = scalar_lea.sflag [#allocation3], %s475
        %s477 = sand.u32 %s160, 1
        %s478 = smul.addr %s477, 4
        %s479 = scalar_lea.vmem [#allocation2], %s478
        // Predicated region
        $region41: #{tpu_custom_call.1} parent=39 // pred_check
          %p480 = pneg %p170
        $region42: #{tpu_custom_call.1} parent=39 // pred_check_branch
          %482 = sbr.rel (%p480) target = $region44
        $region43: #{tpu_custom_call.1} parent=39 // pred_region
          %s484 = ssub.s32 64, 64
          %485 = vsyncadd %s476, %s484
          %s486 = smul.addr %s23, 2
          %s487 = sadd.s32 %s24, %s486
          %s488 = smul.addr %s487, 64
          %s489 = scalar_lea.hbm %s5, %s488
          %s491 = sshll.u32 %s479, 4
          %s492 = int_to_ptr.vmem [resolvable:$true] %s491
          %494 = dma.vmem_to_hbm [thread:$0]  %s492, 64, %s489, %s476
        $region44: #{tpu_custom_call.1} parent=39 // pred_fallthru
          _
      $region40: #{tpu_custom_call.1} parent=5 // pred_fallthru
        _
      %p495 = scmp.le.s32.totalorder 2, %s14
      // Predicated region
      $region45: #{tpu_custom_call.1} parent=5 // pred_check
        %p496 = pneg %p495
      $region46: #{tpu_custom_call.1} parent=5 // pred_check_branch
        %498 = sbr.rel (%p496) target = $region48
      $region47: #{tpu_custom_call.1} parent=5 // pred_region
        %s499 = ssub.s32 %s14, 2
        // Predicated region
        $region49: #{tpu_custom_call.1} parent=47 // pred_check
          %p500 = pneg %p176
        $region50: #{tpu_custom_call.1} parent=47 // pred_check_branch
          %502 = sbr.rel (%p500) target = $region52
        $region51: #{tpu_custom_call.1} parent=47 // pred_region
          %s503 = sand.u32 %s161, 1
          %s504 = scalar_lea.sflag [#allocation3], %s503
          %s505 = sand.u32 %s161, 1
          %s506 = smul.addr %s505, 4
          %s507 = scalar_lea.vmem [#allocation2], %s506
          %508 = dma.done %s504, 64
        $region52: #{tpu_custom_call.1} parent=47 // pred_fallthru
          _
      $region48: #{tpu_custom_call.1} parent=5 // pred_fallthru
        _
    $region6: #{tpu_custom_call.1} parent=1 // loop_footer
      %s18 = sadd.s32 1, %s14
    $region7: #{tpu_custom_call.1} parent=1 // loop_footer_branch
      %13 = sbr.rel target = $region3
    $region8: #{tpu_custom_call.1} parent=1 // loop_exit
      _
    %509 = vsyncpa [#allocation3], 1
    %s510 = scalar_lea.sflag [#allocation3], 1
    %511 = vsyncpa %s510, 1

</llo_original>
